<compile_context>
chip_gen: v5e
topology: v5e:2x2
jax: 0.10.0
libtpu: 0.0.40
codegen_flags: <defaults>
</compile_context>

<pallas_src>
import functools
from typing import NamedTuple

import jax
import jax.numpy as jnp
from jax.experimental import pallas as pl
from jax.experimental.pallas import tpu as pltpu

EPS = 1e-5  # PyTorch BatchNorm1d default eps


def _round_up(x, m):
    return ((x + m - 1) // m) * m


# ---------------------------------------------------------------------------
# Kernel: per-core K-tiled (Bp, tk) @ (tk, Ocat) accumulated in the resident
# f32 output block.  Grid = (num_cores "parallel", k_per_core "arbitrary").
# ---------------------------------------------------------------------------
def bertpunc_kernel(x_ref, w_ref, o_ref):
    k = pl.program_id(1)

    @pl.when(k == 0)
    def _():
        o_ref[...] = jnp.zeros_like(o_ref)

    o_ref[...] += jnp.dot(x_ref[...], w_ref[...],
                          preferred_element_type=jnp.float32)


# ---------------------------------------------------------------------------
# Host-side BN folding (done in f32, BEFORE any bf16 cast).
# ---------------------------------------------------------------------------
def fold_bn_into_linear(bn_params, w, b):
    """bn_params = (gamma, beta, running_mean, running_var); w: (F, O); b: (O,)."""
    gamma, beta, mean, var = [p.astype(jnp.float32) for p in bn_params]
    w = w.astype(jnp.float32)
    b = b.astype(jnp.float32)
    scale = gamma * jax.lax.rsqrt(var + EPS)          # (F,)
    shift = beta - mean * scale                       # (F,)
    w_folded = w * scale[:, None]                     # (F, O)
    b_folded = b + shift @ w                          # (O,)
    return w_folded, b_folded


# ---------------------------------------------------------------------------
# Static tiling plan (Python ints only; computed once per shape/config).
# ---------------------------------------------------------------------------
class Plan(NamedTuple):
    F: int
    O1: int
    O2: int
    Ocat: int
    Bp: int
    Fp: int
    tk: int
    nc: int          # number of "parallel" core slices of the K reduction
    k_per_core: int


def make_plan(B, F, O1, O2, *, tk=10240, num_cores=2):
    """Pick tk to divide F for real shapes (e.g. 10240 for F=256000)."""
    Ocat = O1 + O2
    Bp = _round_up(max(B, 1), 16)          # bf16 LHS packs (16, 128) per vreg
    tk = min(tk, _round_up(F, 128))
    tk = max(128, _round_up(tk, 128))
    k_tiles = pl.cdiv(F, tk)
    nc = num_cores if k_tiles >= num_cores else 1
    k_tiles = _round_up(k_tiles, nc)
    Fp = k_tiles * tk
    return Plan(F=F, O1=O1, O2=O2, Ocat=Ocat, Bp=Bp, Fp=Fp,
                tk=tk, nc=nc, k_per_core=k_tiles // nc)


# ---------------------------------------------------------------------------
# One-time weight preparation (outside the hot path): BN fold, head concat,
# bf16 cast, K padding.  Returns the padded weight and the f32 folded bias.
# ---------------------------------------------------------------------------
def prepare_weights(bn1_params, fc1_w, fc1_b,
                    bn2_params, fc2_w, fc2_b,
                    plan, *, weight_dtype=jnp.bfloat16):
    w1f, b1f = fold_bn_into_linear(bn1_params, fc1_w, fc1_b)
    w2f, b2f = fold_bn_into_linear(bn2_params, fc2_w, fc2_b)
    w_cat = jnp.concatenate([w1f, w2f], axis=1)        # (F, Ocat) f32
    b_cat = jnp.concatenate([b1f, b2f], axis=0)        # (Ocat,)   f32
    w_p = jnp.zeros((plan.Fp, plan.Ocat), weight_dtype).at[:plan.F, :].set(
        w_cat.astype(weight_dtype))
    return w_p, b_cat


# ---------------------------------------------------------------------------
# Hot path: pad activations, run the kernel, sum per-core partials + bias,
# split the two heads.  Dropout is eval-mode identity.
# ---------------------------------------------------------------------------
def bertpunc_apply(x_flat, w_p, b_cat, *, plan, act_dtype=jnp.bfloat16):
    B, F = x_flat.shape
    p = plan
    kpc = p.k_per_core

    x_p = jnp.zeros((p.Bp, p.Fp), act_dtype).at[:B, :F].set(
        x_flat.astype(act_dtype))

    grid_spec = pltpu.PrefetchScalarGridSpec(
        num_scalar_prefetch=0,
        grid=(p.nc, kpc),
        in_specs=[
            # activations: same rows, walk this core's slice of K
            pl.BlockSpec((p.Bp, p.tk), lambda c, k: (0, c * kpc + k)),
            # folded concat weight: full (un-padded) Ocat, walk this core's K
            pl.BlockSpec((p.tk, p.Ocat), lambda c, k: (c * kpc + k, 0)),
        ],
        # one resident f32 partial-output slab per core slice
        out_specs=pl.BlockSpec((None, p.Bp, p.Ocat), lambda c, k: (c, 0, 0)),
    )

    partials = pl.pallas_call(
        bertpunc_kernel,
        out_shape=jax.ShapeDtypeStruct((p.nc, p.Bp, p.Ocat), jnp.float32),
        grid_spec=grid_spec,
        compiler_params=pltpu.CompilerParams(
            dimension_semantics=("parallel", "arbitrary"),
            # conservative: fits v7x's 64 MiB physical VMEM with headroom
            vmem_limit_bytes=48 * 1024 * 1024),
    )(x_p, w_p)

    # Tiny (B, Ocat) epilogue: sum the per-core partials, add folded bias.
    out = partials.sum(axis=0)[:B, :] + b_cat[None, :]
    x1 = out[:, :p.O1]
    x2 = out[:, p.O1:p.Ocat]
    return x1, x2


# ---------------------------------------------------------------------------
# Pure-JAX reference (exact module semantics, f32).
# ---------------------------------------------------------------------------
def reference_heads(x_flat, bn1_params, fc1_w, fc1_b, bn2_params, fc2_w, fc2_b):
    g1, be1, m1, v1 = bn1_params
    g2, be2, m2, v2 = bn2_params
    xn1 = (x_flat - m1) / jnp.sqrt(v1 + EPS) * g1 + be1
    xn2 = (x_flat - m2) / jnp.sqrt(v2 + EPS) * g2 + be2
    return xn1 @ fc1_w + fc1_b, xn2 @ fc2_w + fc2_b


if __name__ == "__main__":
    # Small synthetic shapes consistent with the module's forward:
    #   tokens (B, segment) -> logits (B, segment, vocab) -> flat (B, segment*vocab)
    B = 8
    segment_size = 8
    vocab_size = 64            # stand-in for bert_vocab_size = 32000
    F = segment_size * vocab_size     # 512
    output_size1 = 30          # punctuation-class-sized heads
    output_size2 = 30
    n_token_ids = 64

    key = jax.random.PRNGKey(0)
    keys = jax.random.split(key, 12)

    # Input token ids.
    tokens = jax.random.randint(keys[0], (B, segment_size), 0, n_token_ids)

    # TODO(synk): synthetic stand-in for the pretrained BERT MaskedLM logits.
    logit_table = 0.1 * jax.random.normal(keys[1], (n_token_ids, vocab_size),
                                          dtype=jnp.float32)
    logits = logit_table[tokens]                   # (B, segment, vocab)
    x_flat = logits.reshape(B, -1)                 # (B, F)  == x.view(B, -1)

    # BatchNorm1d parameters (gamma, beta, running_mean, running_var).
    bn1_params = (1.0 + 0.05 * jax.random.normal(keys[2], (F,)),
                  0.05 * jax.random.normal(keys[3], (F,)),
                  0.02 * jax.random.normal(keys[4], (F,)),
                  1.0 + 0.1 * jax.nn.sigmoid(jax.random.normal(keys[5], (F,))))
    bn2_params = (1.0 + 0.05 * jax.random.normal(keys[6], (F,)),
                  0.05 * jax.random.normal(keys[7], (F,)),
                  0.02 * jax.random.normal(keys[8], (F,)),
                  1.0 + 0.1 * jax.nn.sigmoid(jax.random.normal(keys[9], (F,))))

    # Linear weights, stored as (in, out) = PyTorch weight.T
    fc1_w = (jax.random.normal(keys[10], (F, output_size1), dtype=jnp.float32)
             / jnp.sqrt(F))
    fc1_b = 0.01 * jnp.arange(output_size1, dtype=jnp.float32)
    fc2_w = (jax.random.normal(keys[11], (F, output_size2), dtype=jnp.float32)
             / jnp.sqrt(F))
    fc2_b = 0.01 * jnp.arange(output_size2, dtype=jnp.float32)

    # Static plan (demo uses tk=128 so the tiny F=512 still gives 2 K-steps
    # per core slice; for real F=256000 use tk that divides F, e.g. 10240).
    plan = make_plan(B, F, output_size1, output_size2, tk=128, num_cores=2)

    # One-time weight preparation, outside the hot path.
    w_p, b_cat = prepare_weights(bn1_params, fc1_w, fc1_b,
                                 bn2_params, fc2_w, fc2_b, plan)
    jax.block_until_ready((w_p, b_cat))

    apply_fn = jax.jit(functools.partial(bertpunc_apply, plan=plan))
    x1, x2 = apply_fn(x_flat, w_p, b_cat)
    jax.block_until_ready((x1, x2))

    r1, r2 = reference_heads(x_flat, bn1_params, fc1_w, fc1_b,
                             bn2_params, fc2_w, fc2_b)
    # bf16 weight/activation streaming -> relaxed tolerance vs f32 reference.
    assert jnp.allclose(x1, r1, atol=1e-2, rtol=1e-2)
    assert jnp.allclose(x2, r2, atol=1e-2, rtol=1e-2)

    print("KERNEL_OK")
</pallas_src>

<mosaic_0001>
module attributes {stable_mosaic.version = 11 : i64} {
  func.func @bertpunc_kernel(%arg0: i32, %arg1: i32, %arg2: memref<16x128xbf16, #tpu.memory_space<vmem>>, %arg3: memref<128x60xbf16, #tpu.memory_space<vmem>>, %arg4: memref<1x16x60xf32, #tpu.memory_space<vmem>>) attributes {dimension_semantics = [#tpu.dimension_semantics<parallel>, #tpu.dimension_semantics<arbitrary>], iteration_bounds = array<i64: 2, 2>, scalar_prefetch = 0 : i64, scratch_operands = 0 : i64, tpu.core_type = #tpu.core_type<tc>, window_params = [{transform_indices = @transform_0, window_bounds = array<i64: 16, 128>}, {transform_indices = @transform_1, window_bounds = array<i64: 128, 60>}, {transform_indices = @transform_2, window_bounds = array<i64: 1, 16, 60>}]} {
    %c0_i32 = arith.constant 0 : i32
    %0 = arith.cmpi eq, %arg1, %c0_i32 : i32
    %1 = arith.extui %0 : i1 to i32
    %c0_i32_0 = arith.constant 0 : i32
    %2 = arith.cmpi ne, %1, %c0_i32_0 : i32
    scf.if %2 {
      %cst_10 = arith.constant 0.000000e+00 : f32
      %12 = vector.broadcast %cst_10 : f32 to vector<16x60xf32>
      %c0_11 = arith.constant 0 : index
      %c0_12 = arith.constant 0 : index
      %c0_13 = arith.constant 0 : index
      %13 = vector.load %arg4[%c0_11, %c0_12, %c0_13] : memref<1x16x60xf32, #tpu.memory_space<vmem>>, vector<1x16x60xf32>
      %14 = vector.shape_cast %13 : vector<1x16x60xf32> to vector<16x60xf32>
      %15 = vector.shape_cast %12 : vector<16x60xf32> to vector<1x16x60xf32>
      tpu.vector_store %arg4[%c0_11, %c0_12, %c0_13], %15 {strides = array<i32>} : memref<1x16x60xf32, #tpu.memory_space<vmem>>, vector<1x16x60xf32>,
    } else {
    }
    %c0 = arith.constant 0 : index
    %c0_1 = arith.constant 0 : index
    %c0_2 = arith.constant 0 : index
    %3 = vector.load %arg4[%c0, %c0_1, %c0_2] : memref<1x16x60xf32, #tpu.memory_space<vmem>>, vector<1x16x60xf32>
    %4 = vector.shape_cast %3 : vector<1x16x60xf32> to vector<16x60xf32>
    %c0_3 = arith.constant 0 : index
    %c0_4 = arith.constant 0 : index
    %5 = vector.load %arg2[%c0_3, %c0_4] : memref<16x128xbf16, #tpu.memory_space<vmem>>, vector<16x128xbf16>
    %c0_5 = arith.constant 0 : index
    %c0_6 = arith.constant 0 : index
    %6 = vector.load %arg3[%c0_5, %c0_6] : memref<128x60xbf16, #tpu.memory_space<vmem>>, vector<128x60xbf16>
    %cst = arith.constant dense<0.000000e+00> : vector<16x60xf32>
    %7 = tpu.matmul %5, %6, %cst {dimension_numbers = #tpu.dot_dimension_numbers<[1], [0], [0], [1], [0, 0, 1, 1], [], []>} : vector<16x128xbf16>, vector<128x60xbf16>, vector<16x60xf32> -> vector<16x60xf32>
    %8 = arith.addf %4, %7 : vector<16x60xf32>
    %c0_7 = arith.constant 0 : index
    %c0_8 = arith.constant 0 : index
    %c0_9 = arith.constant 0 : index
    %9 = vector.load %arg4[%c0_7, %c0_8, %c0_9] : memref<1x16x60xf32, #tpu.memory_space<vmem>>, vector<1x16x60xf32>
    %10 = vector.shape_cast %9 : vector<1x16x60xf32> to vector<16x60xf32>
    %11 = vector.shape_cast %8 : vector<16x60xf32> to vector<1x16x60xf32>
    tpu.vector_store %arg4[%c0_7, %c0_8, %c0_9], %11 {strides = array<i32>} : memref<1x16x60xf32, #tpu.memory_space<vmem>>, vector<1x16x60xf32>,
    return
  }
  func.func @transform_0(%arg0: i32, %arg1: i32) -> (i32, i32) {
    %c2_i32 = arith.constant 2 : i32
    %0 = arith.muli %arg0, %c2_i32 : i32
    %1 = arith.addi %0, %arg1 : i32
    %c0_i32 = arith.constant 0 : i32
    %c0_i32_0 = arith.constant 0 : i32
    return %c0_i32, %1 : i32, i32
  }
  func.func @transform_1(%arg0: i32, %arg1: i32) -> (i32, i32) {
    %c2_i32 = arith.constant 2 : i32
    %0 = arith.muli %arg0, %c2_i32 : i32
    %1 = arith.addi %0, %arg1 : i32
    %c0_i32 = arith.constant 0 : i32
    %c0_i32_0 = arith.constant 0 : i32
    return %1, %c0_i32 : i32, i32
  }
  func.func @transform_2(%arg0: i32, %arg1: i32) -> (i32, i32, i32) {
    %c0_i32 = arith.constant 0 : i32
    %c0_i32_0 = arith.constant 0 : i32
    %c0_i32_1 = arith.constant 0 : i32
    return %arg0, %c0_i32, %c0_i32_0 : i32, i32, i32
  }
}

</mosaic_0001>

<llo_original>
// kernel: bertpunc_apply.1
$region0: #{bertpunc_apply.1}
  #allocation0 [shape = 'u32[]', space=smem, size = 0x4, offset = 0x4, fixed_abs, tag = 'smem constant byte address 0x4 - core index']
  #allocation1 [shape = 'u32[72,128]{1,0:T(1,128)}', space=vmem, size = 0x9000, scoped, tag = 'internal scratch']
  %s0 = inlined_call_operand.vmem [shape: bf16[16,512], index: 0, kind: input, shape index: {}]
  %s1 = inlined_call_operand.vmem [shape: bf16[512,60], index: 1, kind: input, shape index: {}]
  %s2 = inlined_call_operand.vmem [shape: f32[2,16,60], index: 2, kind: output, shape index: {}]
  %s3 = sld [smem:[#allocation0]]
  $region86: #{bertpunc_apply.1} parent=0
    _
  %s5 = ssub.s32 1, %s3
  %s6 = scalar_select 0, %s5, %s3
  $region1: #{bertpunc_apply.1} parent=0
    #allocation2 [shape = 'u8[8192]{0}', space=vmem, size = 0x2000, scoped, tag = 'input window, operand 0']
    loop: start=0, step=1, limit=6
    $region2: #{bertpunc_apply.1} parent=1 // loop_pre_header
      _
    $region3: #{bertpunc_apply.1} parent=1 // loop_header
      %s8 = sphi 0, %s12
      %p9 = scmp.ge.s32.totalorder %s8, 6
      %s15 = sphi 0, %s27
      %s16 = sphi 0, %s23
      %s17 = sphi 0, %s15
      %s18 = sphi 0, %s16
      %s19 = sphi 0, %s17
      %s20 = sphi 0, %s18
      %s34 = sphi 0, %s36
      %s37 = sphi 0, %s34
      %s38 = sphi 0, %s37
      %s54 = sphi 0, %s38
      %s64 = sphi 0, %s66
      %s67 = sphi 0, %s64
      %s68 = sphi 0, %s67
      %s84 = sphi 0, %s68
      %s90 = sphi 0, %s92
      %s93 = sphi 0, %s90
      %s94 = sphi 0, %s93
      %s110 = sphi 0, %s94
    $region4: #{bertpunc_apply.1} parent=1 // loop_header_branch
      %11 = sbr.rel (%p9) target = $region8
    $region5: #{bertpunc_apply.1} parent=1 // loop_body
      %s13 = ssub.s32 %s8, 1
      %s14 = ssub.s32 %s8, 2
      %s21 = sadd.s32 1, %s16
      %p22 = scmp.ge.s32.totalorder %s21, 2
      %s23 = scalar_select %p22, 0, %s21
      %s24 = sadd.s32 1, %s15
      %s25 = scalar_select %p22, %s24, %s15
      %p26 = scmp.ge.s32.totalorder %s25, 2
      %s27 = scalar_select %p26, 0, %s25
      %s28 = smul.u32 %s15, 2
      %s29 = sadd.s32 %s28, %s16
      %s30 = smul.u32 %s27, 2
      %s31 = sadd.s32 %s30, %s23
      %s32 = ssub.s32 %s29, %s31
      %p33 = scmp.eq.s32.totalorder %s32, 0
      %s35 = sadd.s32 %s34, 1
      %s36 = scalar_select %p33, %s34, %s35
      %p39 = pneg %p33
      %p40 = scmp.eq.s32.totalorder %s8, 3
      %p41 = por %p39, %p40
      %p42 = scmp.ne.s32.totalorder %s34, %s37
      %p43 = scmp.eq.s32.totalorder %s8, 0
      %p44 = por %p42, %p43
      %p45 = scmp.ne.s32.totalorder %s34, %s37
      %p46 = scmp.eq.s32.totalorder %s13, 3
      %p47 = por %p45, %p46
      %p48 = scmp.ne.s32.totalorder %s37, %s38
      %p49 = scmp.eq.s32.totalorder %s13, 0
      %p50 = por %p48, %p49
      %p51 = scmp.ne.s32.totalorder %s37, %s38
      %p52 = scmp.eq.s32.totalorder %s14, 3
      %p53 = por %p51, %p52
      %p55 = scmp.ne.s32.totalorder %s38, %s54
      %p56 = scmp.eq.s32.totalorder %s14, 0
      %p57 = por %p55, %p56
      %s58 = smul.u32 %s15, 2
      %s59 = sadd.s32 %s58, %s16
      %s60 = smul.u32 %s27, 2
      %s61 = sadd.s32 %s60, %s23
      %s62 = ssub.s32 %s59, %s61
      %p63 = scmp.eq.s32.totalorder %s62, 0
      %s65 = sadd.s32 %s64, 1
      %s66 = scalar_select %p63, %s64, %s65
      %p69 = pneg %p63
      %p70 = scmp.eq.s32.totalorder %s8, 3
      %p71 = por %p69, %p70
      %p72 = scmp.ne.s32.totalorder %s64, %s67
      %p73 = scmp.eq.s32.totalorder %s8, 0
      %p74 = por %p72, %p73
      %p75 = scmp.ne.s32.totalorder %s64, %s67
      %p76 = scmp.eq.s32.totalorder %s13, 3
      %p77 = por %p75, %p76
      %p78 = scmp.ne.s32.totalorder %s67, %s68
      %p79 = scmp.eq.s32.totalorder %s13, 0
      %p80 = por %p78, %p79
      %p81 = scmp.ne.s32.totalorder %s67, %s68
      %p82 = scmp.eq.s32.totalorder %s14, 3
      %p83 = por %p81, %p82
      %p85 = scmp.ne.s32.totalorder %s68, %s84
      %p86 = scmp.eq.s32.totalorder %s14, 0
      %p87 = por %p85, %p86
      %s88 = ssub.s32 %s15, %s27
      %p89 = scmp.eq.s32.totalorder %s88, 0
      %s91 = sadd.s32 %s90, 1
      %s92 = scalar_select %p89, %s90, %s91
      %p95 = pneg %p89
      %p96 = scmp.eq.s32.totalorder %s8, 3
      %p97 = por %p95, %p96
      %p98 = scmp.ne.s32.totalorder %s90, %s93
      %p99 = scmp.eq.s32.totalorder %s8, 0
      %p100 = por %p98, %p99
      %p101 = scmp.ne.s32.totalorder %s90, %s93
      %p102 = scmp.eq.s32.totalorder %s13, 3
      %p103 = por %p101, %p102
      %p104 = scmp.ne.s32.totalorder %s93, %s94
      %p105 = scmp.eq.s32.totalorder %s13, 0
      %p106 = por %p104, %p105
      %p107 = scmp.ne.s32.totalorder %s93, %s94
      %p108 = scmp.eq.s32.totalorder %s14, 3
      %p109 = por %p107, %p108
      %p111 = scmp.ne.s32.totalorder %s94, %s110
      %p112 = scmp.eq.s32.totalorder %s14, 0
      %p113 = por %p111, %p112
      %p114 = scmp.le.s32.totalorder 1, %s8
      %p115 = scmp.lt.s32.totalorder %s8, 5
      %p116 = pnand %p114, %p115
      %p117 = pneg %p116
      // Predicated region
      $region9: #{bertpunc_apply.1} parent=5 // pred_check
        _
      $region10: #{bertpunc_apply.1} parent=5 // pred_check_branch
        %119 = sbr.rel (%p116) target = $region12
      $region11: #{bertpunc_apply.1} parent=5 // pred_region
        %s120 = ssub.s32 %s8, 1
      $region12: #{bertpunc_apply.1} parent=5 // pred_fallthru
        _
      %p121 = scmp.lt.s32.totalorder %s8, 4
      // Predicated region
      $region13: #{bertpunc_apply.1} parent=5 // pred_check
        %p122 = pneg %p121
      $region14: #{bertpunc_apply.1} parent=5 // pred_check_branch
        %124 = sbr.rel (%p122) target = $region16
      $region15: #{bertpunc_apply.1} parent=5 // pred_region
        // Predicated region
        $region17: #{bertpunc_apply.1} parent=15 // pred_check
          %p125 = pneg %p44
        $region18: #{bertpunc_apply.1} parent=15 // pred_check_branch
          %127 = sbr.rel (%p125) target = $region20
        $region19: #{bertpunc_apply.1} parent=15 // pred_region
          %s128 = sand.u32 %s34, 1
          %s129 = sand.u32 %s34, 1
          %s130 = smul.addr %s129, 8
          %s131 = scalar_lea.vmem [#allocation2], %s130
          %s132 = smul.u32 %s15, 2
          %s133 = sadd.s32 %s132, %s16
          %s134 = smul.addr %s133, 4
          %s135 = scalar_lea.vmem %s0, %s134
          // Predicated region
          $region21: #{bertpunc_apply.1} parent=19 // pred_check
            _
          $region22: #{bertpunc_apply.1} parent=19 // pred_check_branch
            %137 = sbr.rel (0) target = $region24
          $region23: #{bertpunc_apply.1} parent=19 // pred_region
            // Predicated region
            $region25: #{bertpunc_apply.1} parent=23 // pred_check
              _
            $region26: #{bertpunc_apply.1} parent=23 // pred_check_branch
              %139 = sbr.rel target = $region28
            $region27: #{bertpunc_apply.1} parent=23 // pred_region
              // Predicated region
              $region40: #{bertpunc_apply.1} parent=27 // pred_check
                _
              $region41: #{bertpunc_apply.1} parent=27 // pred_check_branch
                %157 = sbr.rel (0) target = $region43
              $region42: #{bertpunc_apply.1} parent=27 // pred_region
                loop: start=0, step=1, limit=1
                $region44: #{bertpunc_apply.1} parent=42 // loop_pre_header
                  _
                $region45: #{bertpunc_apply.1} parent=42 // loop_header
                  %s159 = sphi 0, %s163
                  %p160 = scmp.ge.s32.totalorder %s159, 1
                  %s164 = sphi %s135, %s135
                  %s165 = sphi %s131, %s131
                $region46: #{bertpunc_apply.1} parent=42 // loop_header_branch
                  %162 = sbr.rel (%p160) target = $region50
                $region47: #{bertpunc_apply.1} parent=42 // loop_body
                  _
                $region48: #{bertpunc_apply.1} parent=42 // loop_footer
                  %s163 = sadd.s32 1, %s159
                $region49: #{bertpunc_apply.1} parent=42 // loop_footer_branch
                  %158 = sbr.rel target = $region45
                $region50: #{bertpunc_apply.1} parent=42 // loop_exit
                  _
                %s167 = ssub.s32 16, 1
                loop: start=0, step=1, limit=1
                $region51: #{bertpunc_apply.1} parent=42 // loop_pre_header
                  _
                $region52: #{bertpunc_apply.1} parent=42 // loop_header
                  %s169 = sphi 0, %s173
                  %p170 = scmp.ge.s32.totalorder %s169, 1
                  %s174 = sphi %s135, %s135
                  %s175 = sphi %s131, %s131
                $region53: #{bertpunc_apply.1} parent=42 // loop_header_branch
                  %172 = sbr.rel (%p170) target = $region57
                $region54: #{bertpunc_apply.1} parent=42 // loop_body
                  %v176 = vld [vmem:[%s174] sm:%s167]
                  %177 = vst [vmem:[%s175] sm:%s167] %v176
                  %v178 = vld [vmem:[%s174 + $0x10] sm:%s167]
                  %179 = vst [vmem:[%s175 + $0x4] sm:%s167] %v178
                $region55: #{bertpunc_apply.1} parent=42 // loop_footer
                  %s173 = sadd.s32 1, %s169
                $region56: #{bertpunc_apply.1} parent=42 // loop_footer_branch
                  %168 = sbr.rel target = $region52
                $region57: #{bertpunc_apply.1} parent=42 // loop_exit
                  _
              $region43: #{bertpunc_apply.1} parent=27 // pred_fallthru
                _
            $region28: #{bertpunc_apply.1} parent=23 // pred_fallthru
              _
            // Predicated region
            $region29: #{bertpunc_apply.1} parent=23 // pred_check
              _
            $region30: #{bertpunc_apply.1} parent=23 // pred_check_branch
              %141 = sbr.rel (0) target = $region32
            $region31: #{bertpunc_apply.1} parent=23 // pred_region
              %s143 = ssub.s32 16, 1
              loop: start=0, step=1, limit=1
              $region33: #{bertpunc_apply.1} parent=31 // loop_pre_header
                _
              $region34: #{bertpunc_apply.1} parent=31 // loop_header
                %s145 = sphi 0, %s149
                %p146 = scmp.ge.s32.totalorder %s145, 1
                %s150 = sphi %s135, %s135
                %s151 = sphi %s131, %s131
              $region35: #{bertpunc_apply.1} parent=31 // loop_header_branch
                %148 = sbr.rel (%p146) target = $region39
              $region36: #{bertpunc_apply.1} parent=31 // loop_body
                %v152 = vld [vmem:[%s150] sm:%s143]
                %153 = vst [vmem:[%s151] sm:%s143] %v152
                %v154 = vld [vmem:[%s150 + $0x10] sm:%s143]
                %155 = vst [vmem:[%s151 + $0x4] sm:%s143] %v154
              $region37: #{bertpunc_apply.1} parent=31 // loop_footer
                %s149 = sadd.s32 1, %s145
              $region38: #{bertpunc_apply.1} parent=31 // loop_footer_branch
                %144 = sbr.rel target = $region34
              $region39: #{bertpunc_apply.1} parent=31 // loop_exit
                _
            $region32: #{bertpunc_apply.1} parent=23 // pred_fallthru
              _
          $region24: #{bertpunc_apply.1} parent=19 // pred_fallthru
            _
          %180 = vnop
        $region20: #{bertpunc_apply.1} parent=15 // pred_fallthru
          _
        // Predicated region
        $region58: #{bertpunc_apply.1} parent=15 // pred_check
          %p181 = pneg %p74
        $region59: #{bertpunc_apply.1} parent=15 // pred_check_branch
          %183 = sbr.rel (%p181) target = $region61
        $region60: #{bertpunc_apply.1} parent=15 // pred_region
          %s184 = smul.u32 %s15, 2
          %s185 = sadd.s32 %s184, %s16
          %s186 = smul.u32 16, %s185
          %p187 = scmp.lt.s32.totalorder %s186, 63
          %s188 = scalar_select %p187, %s186, 63
          %s189 = smul.addr %s188, 4
          %s190 = scalar_lea.vmem %s1, %s189
          %s191 = smul.u32 %s15, 2
          %s192 = sadd.s32 %s191, %s16
          %s193 = smul.u32 16, %s192
        $region61: #{bertpunc_apply.1} parent=15 // pred_fallthru
          _
      $region16: #{bertpunc_apply.1} parent=5 // pred_fallthru
        _
      %p194 = scmp.le.s32.totalorder 1, %s8
      %p195 = scmp.lt.s32.totalorder %s8, 5
      %p196 = pnand %p194, %p195
      %p197 = pneg %p196
      // Predicated region
      $region62: #{bertpunc_apply.1} parent=5 // pred_check
        _
      $region63: #{bertpunc_apply.1} parent=5 // pred_check_branch
        %199 = sbr.rel (%p196) target = $region65
      $region64: #{bertpunc_apply.1} parent=5 // pred_region
        %s200 = ssub.s32 %s8, 1
        %s201 = sand.u32 %s37, 1
        %s202 = sand.u32 %s37, 1
        %s203 = smul.addr %s202, 8
        %s204 = scalar_lea.vmem [#allocation2], %s203
        // Predicated region
        $region66: #{bertpunc_apply.1} parent=64 // pred_check
          %p205 = pneg %p50
        $region67: #{bertpunc_apply.1} parent=64 // pred_check_branch
          %207 = sbr.rel (%p205) target = $region69
        $region68: #{bertpunc_apply.1} parent=64 // pred_region
          _
        $region69: #{bertpunc_apply.1} parent=64 // pred_fallthru
          _
        %s208 = sand.u32 %s37, 1
        %s209 = sand.u32 %s37, 1
        %s210 = smul.addr %s209, 8
        %s211 = scalar_lea.vmem [#allocation2], %s210
        %p212 = pneg %p50
        %p213 = pneg %p47
        %s214 = smul.u32 %s17, 2
        %s215 = sadd.s32 %s214, %s18
        %s216 = smul.u32 16, %s215
        %p217 = scmp.lt.s32.totalorder %s216, 63
        %s218 = scalar_select %p217, %s216, 63
        %s219 = smul.addr %s218, 4
        %s220 = scalar_lea.vmem %s1, %s219
        %p221 = pneg %p80
        %p222 = pneg %p77
        %p223 = pneg %p106
        %p224 = pneg %p103
        %p225 = scmp.lt.s32.totalorder %s17, 1
        %s226 = scalar_select %p225, %s17, 1
        %s227 = smul.addr %s226, 2
        %s228 = smul.addr %s227, 8
        %s229 = scalar_lea.vmem %s2, %s228
        %s230 = smul.u32 %s17, 2
        %s231 = sadd.s32 %s230, %s18
        %s232 = smul.u32 %s17, 2
        %s233 = sadd.s32 %s232, %s18
        %s234 = smul.u32 16, %s233
        %p235 = scmp.lt.s32.totalorder %s234, 63
        %s236 = scalar_select %p235, %s234, 63
        %s237 = smul.addr %s236, 4
        %s238 = scalar_lea.vmem %s1, %s237
        %s239 = smul.u32 %s17, 2
        %s240 = sadd.s32 %s239, %s18
        %s241 = smul.u32 16, %s240
        %p242 = scmp.lt.s32.totalorder %s17, 1
        %s243 = scalar_select %p242, %s17, 1
        %s244 = smul.addr %s243, 2
        %s245 = smul.addr %s244, 8
        %s246 = scalar_lea.vmem %s2, %s245
        %p247 = scmp.eq.s32.totalorder %s18, 0
        // Predicated region
        $region70: #{bertpunc_apply.1} parent=64 // pred_check
          %p248 = pneg %p247
        $region71: #{bertpunc_apply.1} parent=64 // pred_check_branch
          %250 = sbr.rel (%p248) target = $region73
        $region72: #{bertpunc_apply.1} parent=64 // pred_region
          %vm251 = vcmask 490496
          %252 = vst.msk [vmem:[%s246] sm:$0xff] %vm251, 0.0
          %253 = vst.msk [vmem:[%s246 + $0x8] sm:$0xff] %vm251, 0.0
        $region73: #{bertpunc_apply.1} parent=64 // pred_fallthru
          _
        %v254 = vld [vmem:[%s246] sm:$0xff]
        %v255 = vld [vmem:[%s246 + $0x8] sm:$0xff]
        %v256 = vld [vmem:[%s204] sm:$0xf]
        %v257 = vld [vmem:[%s204 + $0x4] sm:$0xf]
        %v258 = vld [vmem:[%s238] sm:$0xf]
        %v259 = vld [vmem:[%s238 + $0x4] sm:$0xf]
        %v260 = vld [vmem:[%s238 + $0x8] sm:$0xf]
        %v261 = vld [vmem:[%s238 + $0xc] sm:$0xf]
        %v262 = vld [vmem:[%s238 + $0x10] sm:$0xf]
        %v263 = vld [vmem:[%s238 + $0x14] sm:$0xf]
        %v264 = vld [vmem:[%s238 + $0x18] sm:$0xf]
        %v265 = vld [vmem:[%s238 + $0x1c] sm:$0xf]
        %v266 = vld [vmem:[%s238 + $0x20] sm:$0xf]
        %v267 = vld [vmem:[%s238 + $0x24] sm:$0xf]
        %v268 = vld [vmem:[%s238 + $0x28] sm:$0xf]
        %v269 = vld [vmem:[%s238 + $0x2c] sm:$0xf]
        %v270 = vld [vmem:[%s238 + $0x30] sm:$0xf]
        %v271 = vld [vmem:[%s238 + $0x34] sm:$0xf]
        %v272 = vld [vmem:[%s238 + $0x38] sm:$0xf]
        %v273 = vld [vmem:[%s238 + $0x3c] sm:$0xf]
        %v276 = vunpack.c.l.b16 %v256
        %v277 = vunpack.c.l.b16 %v257
        %v278 = vpack.c.b16 %v277, %v276
        %v296 = vunpack.c.l.b16 %v258
        %v297 = vunpack.c.l.b16 %v259
        %v298 = vunpack.c.l.b16 %v260
        %v299 = vunpack.c.l.b16 %v261
        %v300 = vunpack.c.l.b16 %v262
        %v301 = vunpack.c.l.b16 %v263
        %v302 = vunpack.c.l.b16 %v264
        %v303 = vunpack.c.l.b16 %v265
        %v304 = vunpack.c.l.b16 %v266
        %v305 = vunpack.c.l.b16 %v267
        %v306 = vunpack.c.l.b16 %v268
        %v307 = vunpack.c.l.b16 %v269
        %v308 = vunpack.c.l.b16 %v270
        %v309 = vunpack.c.l.b16 %v271
        %v310 = vunpack.c.l.b16 %v272
        %v311 = vunpack.c.l.b16 %v273
        %v312 = vpack.c.b16 %v297, %v296
        %v313 = vpack.c.b16 %v299, %v298
        %v314 = vpack.c.b16 %v301, %v300
        %v315 = vpack.c.b16 %v303, %v302
        %v316 = vpack.c.b16 %v305, %v304
        %v317 = vpack.c.b16 %v307, %v306
        %v318 = vpack.c.b16 %v309, %v308
        %v319 = vpack.c.b16 %v311, %v310
        %328 = vmatpush.bf16.msra.mxu0 %v319
        %329 = vmatpush.bf16.msra.mxu0 %v318
        %330 = vmatpush.bf16.msra.mxu0 %v317
        %331 = vmatpush.bf16.msra.mxu0 %v316
        %332 = vmatpush.bf16.msra.mxu0 %v315
        %333 = vmatpush.bf16.msra.mxu0 %v314
        %334 = vmatpush.bf16.msra.mxu0 %v313
        %335 = vmatpush.bf16.msra.mxu0 %v312
        %336 = vmatmul.bf16.gmra.mxu0 %v278
        %v337 = vpop.f32.mrf.mxu0
        %v338 = vadd.f32 0.0, %v337
        %v339 = vpop.f32.mrf.mxu0
        %v340 = vadd.f32 0.0, %v339
        %341 = vdwg.mxu0
        %v342 = vadd.f32 %v254, %v338
        %v343 = vadd.f32 %v255, %v340
        %vm344 = vcmask 490496
        %345 = vst.msk [vmem:[%s246] sm:$0xff] %vm344, %v342
        %346 = vst.msk [vmem:[%s246 + $0x8] sm:$0xff] %vm344, %v343
        %p347 = scmp.lt.s32.totalorder %s17, 1
        %s348 = scalar_select %p347, %s17, 1
        %s349 = smul.addr %s348, 2
        %s350 = smul.addr %s349, 8
        %s351 = scalar_lea.vmem %s2, %s350
        // Predicated region
        $region74: #{bertpunc_apply.1} parent=64 // pred_check
          %p352 = pneg %p103
        $region75: #{bertpunc_apply.1} parent=64 // pred_check_branch
          %354 = sbr.rel (%p352) target = $region77
        $region76: #{bertpunc_apply.1} parent=64 // pred_region
          _
        $region77: #{bertpunc_apply.1} parent=64 // pred_fallthru
          _
      $region65: #{bertpunc_apply.1} parent=5 // pred_fallthru
        _
      %p355 = scmp.le.s32.totalorder 2, %s8
      // Predicated region
      $region78: #{bertpunc_apply.1} parent=5 // pred_check
        %p356 = pneg %p355
      $region79: #{bertpunc_apply.1} parent=5 // pred_check_branch
        %358 = sbr.rel (%p356) target = $region81
      $region80: #{bertpunc_apply.1} parent=5 // pred_region
        %s359 = ssub.s32 %s8, 2
        // Predicated region
        $region82: #{bertpunc_apply.1} parent=80 // pred_check
          %p360 = pneg %p109
        $region83: #{bertpunc_apply.1} parent=80 // pred_check_branch
          %362 = sbr.rel (%p360) target = $region85
        $region84: #{bertpunc_apply.1} parent=80 // pred_region
          %p363 = scmp.lt.s32.totalorder %s19, 1
          %s364 = scalar_select %p363, %s19, 1
          %s365 = smul.addr %s364, 2
          %s366 = smul.addr %s365, 8
          %s367 = scalar_lea.vmem %s2, %s366
        $region85: #{bertpunc_apply.1} parent=80 // pred_fallthru
          _
      $region81: #{bertpunc_apply.1} parent=5 // pred_fallthru
        _
    $region6: #{bertpunc_apply.1} parent=1 // loop_footer
      %s12 = sadd.s32 1, %s8
    $region7: #{bertpunc_apply.1} parent=1 // loop_footer_branch
      %7 = sbr.rel target = $region3
    $region8: #{bertpunc_apply.1} parent=1 // loop_exit
      _

</llo_original>
